<compile_context>
chip_gen: v5e
topology: v5e:2x2
jax: 0.10.0
libtpu: 0.0.40
codegen_flags: <defaults>
</compile_context>

<pallas_src>
import functools

import jax
import jax.numpy as jnp
from jax import lax
from jax.experimental import pallas as pl
from jax.experimental.pallas import tpu as pltpu


def mha_kernel(x_ref, wqkv_ref, wp_ref, bias_ref, o_ref, *, num_heads: int):
    """One batch element per grid step.

    x_ref:    (1, T, C)   bf16  activations
    wqkv_ref: (C, 3*C)    bf16  fused [Wq | Wk | Wv] (columns grouped per head)
    wp_ref:   (C, C)      bf16  output projection weight (input-major, x @ Wp)
    bias_ref: (1, C)      f32   output projection bias
    o_ref:    (1, T, C)   f32   output
    """
    x = x_ref[0]                                             # (T, C) bf16
    T, C = x.shape
    hs = C // num_heads
    scale = C ** (-0.5)  # NOTE: embedding-dim scaling, matching the torch module.

    # ---- fused QKV projection: one wide MXU matmul, f32 accumulation --------
    qkv = jnp.dot(x, wqkv_ref[...], preferred_element_type=jnp.float32)  # (T, 3C)
    qkv = qkv.astype(jnp.bfloat16)

    # ---- split into head-batched (H, T, hs) operands (data movement only;
    #      every matmul below is a head-batched / dense dot on the MXU) -------
    def split_heads(base):
        parts = [qkv[None, :, base + h * hs: base + (h + 1) * hs]
                 for h in range(num_heads)]
        return jnp.concatenate(parts, axis=0)                # (H, T, hs) bf16

    q = split_heads(0)
    k = split_heads(C)
    v = split_heads(2 * C)

    # ---- causal mask: built once, shared by all heads (additive bias) -------
    row = lax.broadcasted_iota(jnp.int32, (T, T), 0)
    col = lax.broadcasted_iota(jnp.int32, (T, T), 1)
    mask_bias = jnp.where(row >= col, 0.0, -jnp.inf).astype(jnp.float32)  # (T, T)

    # ---- head-batched attention (flash-style einsum patterns) ---------------
    s = jnp.einsum('hqd,hkd->hqk', q, k,
                   preferred_element_type=jnp.float32) * scale           # (H, T, T)
    s = s + mask_bias[None]
    s = s - jnp.max(s, axis=-1, keepdims=True)
    p = jnp.exp(s)                                                       # f32 softmax
    p = p * pl.reciprocal(jnp.sum(p, axis=-1, keepdims=True), approx=True)
    # TODO(synk): attention-probability dropout (training mode) not implemented.
    o_heads = jnp.einsum('hqk,hkd->hqd', p.astype(jnp.bfloat16), v,
                         preferred_element_type=jnp.float32)             # (H, T, hs)

    # ---- output projection: concat heads along lanes, ONE dense matmul ------
    #   y = concat_h(o_heads) @ Wp + b   (single (T,C)@(C,C) MXU op, full-C
    #   contraction; no (H,T,C) intermediate, no cross-head reduce)
    o_cat = jnp.concatenate([o_heads[h] for h in range(num_heads)],
                            axis=-1).astype(jnp.bfloat16)                # (T, C)
    y = jnp.dot(o_cat, wp_ref[...],
                preferred_element_type=jnp.float32) + bias_ref[...]      # (T, C)
    # TODO(synk): output dropout (training mode) not implemented.
    o_ref[0] = y.astype(o_ref.dtype)


def multi_head_attention(x, wqkv, wp, bias, *, num_heads):
    """x: (B,T,C) f32; wqkv: (C,3C); wp: (C,C) input-major; bias: (1,C)."""
    B, T, C = x.shape
    hs = C // num_heads
    out_dtype = x.dtype

    kernel = functools.partial(mha_kernel, num_heads=num_heads)

    flops = 2 * B * (T * C * 3 * C                 # fused QKV projection
                     + 2 * num_heads * T * T * hs  # QK^T and PV
                     + T * C * C)                  # output projection
    transcendentals = B * num_heads * T * T        # exp in softmax
    bytes_accessed = (B * T * C * 2        # x (bf16)
                      + C * 3 * C * 2      # wqkv (bf16)
                      + C * C * 2          # wp (bf16)
                      + C * 4              # bias (f32)
                      + B * T * C * 4)     # output (f32)
    cost = pl.CostEstimate(flops=flops, transcendentals=transcendentals,
                           bytes_accessed=bytes_accessed)

    return pl.pallas_call(
        kernel,
        out_shape=jax.ShapeDtypeStruct((B, T, C), out_dtype),
        grid_spec=pltpu.PrefetchScalarGridSpec(
            num_scalar_prefetch=0,
            grid=(B,),
            in_specs=[
                pl.BlockSpec((1, T, C), lambda b: (b, 0, 0)),   # x
                pl.BlockSpec((C, 3 * C), lambda b: (0, 0)),     # Wqkv (resident)
                pl.BlockSpec((C, C), lambda b: (0, 0)),         # Wp   (resident)
                pl.BlockSpec((1, C), lambda b: (0, 0)),         # bias (resident)
            ],
            out_specs=pl.BlockSpec((1, T, C), lambda b: (b, 0, 0)),
        ),
        compiler_params=pltpu.CompilerParams(
            dimension_semantics=("parallel",)),
        cost_estimate=cost,
    )(x.astype(jnp.bfloat16), wqkv.astype(jnp.bfloat16),
      wp.astype(jnp.bfloat16), bias.astype(jnp.float32))


def reference_mha(x, wq_all, wk_all, wv_all, wp_t, bp, *, num_heads):
    """Pure-JAX f32 reference mirroring the PyTorch forward (eval mode)."""
    B, T, C = x.shape
    hs = C // num_heads
    q = x @ wq_all
    k = x @ wk_all
    v = x @ wv_all
    causal = jnp.tril(jnp.ones((T, T), dtype=bool))
    outs = []
    for h in range(num_heads):
        qh = q[..., h * hs:(h + 1) * hs]
        kh = k[..., h * hs:(h + 1) * hs]
        vh = v[..., h * hs:(h + 1) * hs]
        s = jnp.einsum('btd,bsd->bts', qh, kh) * C ** (-0.5)
        s = jnp.where(causal[None], s, -jnp.inf)
        p = jax.nn.softmax(s, axis=-1)
        outs.append(jnp.einsum('bts,bsd->btd', p, vh))
    concat = jnp.concatenate(outs, axis=-1)
    return concat @ wp_t + bp


if __name__ == "__main__":
    # Shapes consistent with the module:
    #   num_heads=4, embedding_dim=32 -> head_size=8, block_size=T=8, batch=2
    B, T, C, H = 2, 8, 32, 4
    hs = C // H

    key = jax.random.PRNGKey(0)
    kx, kq, kk, kv, kp, kb = jax.random.split(key, 6)

    x = jax.random.normal(kx, (B, T, C), dtype=jnp.float32)

    # Per-head Linear(embedding_dim, head_size, bias=False) weights: (H, hs, C),
    # uniform in +-1/sqrt(C) (torch.nn.Linear default init range).
    bound_in = 1.0 / (C ** 0.5)
    wq_heads = jax.random.uniform(kq, (H, hs, C), jnp.float32, -bound_in, bound_in)
    wk_heads = jax.random.uniform(kk, (H, hs, C), jnp.float32, -bound_in, bound_in)
    wv_heads = jax.random.uniform(kv, (H, hs, C), jnp.float32, -bound_in, bound_in)

    # x @ W_h.T per head == x @ concat_h(W_h.T)  (columns grouped per head).
    to_all = lambda w_heads: jnp.concatenate(
        [w_heads[h].T for h in range(H)], axis=1)            # (C, C)
    wq_all = to_all(wq_heads)
    wk_all = to_all(wk_heads)
    wv_all = to_all(wv_heads)
    wqkv = jnp.concatenate([wq_all, wk_all, wv_all], axis=1)  # (C, 3C) fused QKV

    # Output projection Linear(C, C) with bias.
    wp = jax.random.uniform(kp, (C, C), jnp.float32, -bound_in, bound_in)  # (out, in)
    bp = jax.random.uniform(kb, (C,), jnp.float32, -bound_in, bound_in)
    wp_t = wp.T                                               # (in, out)
    bias_row = bp.reshape(1, C)

    out = multi_head_attention(x, wqkv, wp_t, bias_row, num_heads=H)
    out = jax.block_until_ready(out)

    ref = reference_mha(x, wq_all, wk_all, wv_all, wp_t, bias_row, num_heads=H)
    assert out.shape == (B, T, C)
    max_err = float(jnp.max(jnp.abs(out - ref)))
    # bf16 MXU inputs (f32 accumulation) vs. pure-f32 reference -> relaxed tol.
    assert jnp.allclose(out, ref, atol=5e-2, rtol=5e-2), (
        f"mismatch vs reference (max abs err {max_err})")

    print("KERNEL_OK")
</pallas_src>

<mosaic_0001>
module attributes {stable_mosaic.version = 11 : i64} {
  func.func @mha_kernel(%arg0: i32, %arg1: memref<1x8x32xbf16, #tpu.memory_space<vmem>>, %arg2: memref<32x96xbf16, #tpu.memory_space<vmem>>, %arg3: memref<32x32xbf16, #tpu.memory_space<vmem>>, %arg4: memref<1x32xf32, #tpu.memory_space<vmem>>, %arg5: memref<1x8x32xf32, #tpu.memory_space<vmem>>) attributes {dimension_semantics = [#tpu.dimension_semantics<parallel>], iteration_bounds = array<i64: 2>, scalar_prefetch = 0 : i64, scratch_operands = 0 : i64, tpu.core_type = #tpu.core_type<tc>, window_params = [{transform_indices = @transform_0, window_bounds = array<i64: 1, 8, 32>}, {pipeline_mode = #tpu.pipeline_mode<synchronous>, transform_indices = @transform_1, window_bounds = array<i64: 32, 96>}, {pipeline_mode = #tpu.pipeline_mode<synchronous>, transform_indices = @transform_2, window_bounds = array<i64: 32, 32>}, {pipeline_mode = #tpu.pipeline_mode<synchronous>, transform_indices = @transform_3, window_bounds = array<i64: 1, 32>}, {transform_indices = @transform_4, window_bounds = array<i64: 1, 8, 32>}]} {
    %c0 = arith.constant 0 : index
    %c0_0 = arith.constant 0 : index
    %c0_1 = arith.constant 0 : index
    %0 = vector.load %arg1[%c0, %c0_0, %c0_1] : memref<1x8x32xbf16, #tpu.memory_space<vmem>>, vector<1x8x32xbf16>
    %1 = vector.shape_cast %0 : vector<1x8x32xbf16> to vector<8x32xbf16>
    %c0_2 = arith.constant 0 : index
    %c0_3 = arith.constant 0 : index
    %2 = vector.load %arg2[%c0_2, %c0_3] : memref<32x96xbf16, #tpu.memory_space<vmem>>, vector<32x96xbf16>
    %cst = arith.constant dense<0.000000e+00> : vector<8x96xf32>
    %3 = tpu.matmul %1, %2, %cst {dimension_numbers = #tpu.dot_dimension_numbers<[1], [0], [0], [1], [0, 0, 1, 1], [], []>} : vector<8x32xbf16>, vector<32x96xbf16>, vector<8x96xf32> -> vector<8x96xf32>
    %4 = arith.truncf %3 : vector<8x96xf32> to vector<8x96xbf16>
    %5 = vector.extract_strided_slice %4 {offsets = [0, 0], sizes = [8, 8], strides = [1, 1]} : vector<8x96xbf16> to vector<8x8xbf16>
    %6 = vector.shape_cast %5 : vector<8x8xbf16> to vector<1x8x8xbf16>
    %7 = vector.extract_strided_slice %4 {offsets = [0, 8], sizes = [8, 8], strides = [1, 1]} : vector<8x96xbf16> to vector<8x8xbf16>
    %8 = vector.shape_cast %7 : vector<8x8xbf16> to vector<1x8x8xbf16>
    %9 = vector.extract_strided_slice %4 {offsets = [0, 16], sizes = [8, 8], strides = [1, 1]} : vector<8x96xbf16> to vector<8x8xbf16>
    %10 = vector.shape_cast %9 : vector<8x8xbf16> to vector<1x8x8xbf16>
    %11 = vector.extract_strided_slice %4 {offsets = [0, 24], sizes = [8, 8], strides = [1, 1]} : vector<8x96xbf16> to vector<8x8xbf16>
    %12 = vector.shape_cast %11 : vector<8x8xbf16> to vector<1x8x8xbf16>
    %13 = tpu.concatenate %6, %8, %10, %12 in 0 : vector<1x8x8xbf16>, vector<1x8x8xbf16>, vector<1x8x8xbf16>, vector<1x8x8xbf16> -> vector<4x8x8xbf16>
    %14 = vector.extract_strided_slice %4 {offsets = [0, 32], sizes = [8, 8], strides = [1, 1]} : vector<8x96xbf16> to vector<8x8xbf16>
    %15 = vector.shape_cast %14 : vector<8x8xbf16> to vector<1x8x8xbf16>
    %16 = vector.extract_strided_slice %4 {offsets = [0, 40], sizes = [8, 8], strides = [1, 1]} : vector<8x96xbf16> to vector<8x8xbf16>
    %17 = vector.shape_cast %16 : vector<8x8xbf16> to vector<1x8x8xbf16>
    %18 = vector.extract_strided_slice %4 {offsets = [0, 48], sizes = [8, 8], strides = [1, 1]} : vector<8x96xbf16> to vector<8x8xbf16>
    %19 = vector.shape_cast %18 : vector<8x8xbf16> to vector<1x8x8xbf16>
    %20 = vector.extract_strided_slice %4 {offsets = [0, 56], sizes = [8, 8], strides = [1, 1]} : vector<8x96xbf16> to vector<8x8xbf16>
    %21 = vector.shape_cast %20 : vector<8x8xbf16> to vector<1x8x8xbf16>
    %22 = tpu.concatenate %15, %17, %19, %21 in 0 : vector<1x8x8xbf16>, vector<1x8x8xbf16>, vector<1x8x8xbf16>, vector<1x8x8xbf16> -> vector<4x8x8xbf16>
    %23 = vector.extract_strided_slice %4 {offsets = [0, 64], sizes = [8, 8], strides = [1, 1]} : vector<8x96xbf16> to vector<8x8xbf16>
    %24 = vector.shape_cast %23 : vector<8x8xbf16> to vector<1x8x8xbf16>
    %25 = vector.extract_strided_slice %4 {offsets = [0, 72], sizes = [8, 8], strides = [1, 1]} : vector<8x96xbf16> to vector<8x8xbf16>
    %26 = vector.shape_cast %25 : vector<8x8xbf16> to vector<1x8x8xbf16>
    %27 = vector.extract_strided_slice %4 {offsets = [0, 80], sizes = [8, 8], strides = [1, 1]} : vector<8x96xbf16> to vector<8x8xbf16>
    %28 = vector.shape_cast %27 : vector<8x8xbf16> to vector<1x8x8xbf16>
    %29 = vector.extract_strided_slice %4 {offsets = [0, 88], sizes = [8, 8], strides = [1, 1]} : vector<8x96xbf16> to vector<8x8xbf16>
    %30 = vector.shape_cast %29 : vector<8x8xbf16> to vector<1x8x8xbf16>
    %31 = tpu.concatenate %24, %26, %28, %30 in 0 : vector<1x8x8xbf16>, vector<1x8x8xbf16>, vector<1x8x8xbf16>, vector<1x8x8xbf16> -> vector<4x8x8xbf16>
    %32 = tpu.iota {dimensions = array<i32: 0>} : vector<8x8xi32>
    %33 = tpu.iota {dimensions = array<i32: 1>} : vector<8x8xi32>
    %34 = arith.cmpi sge, %32, %33 : vector<8x8xi32>
    %cst_4 = arith.constant 0.000000e+00 : f32
    %cst_5 = arith.constant 0xFF800000 : f32
    %35 = vector.broadcast %cst_4 : f32 to vector<8x8xf32>
    %36 = vector.broadcast %cst_5 : f32 to vector<8x8xf32>
    %37 = arith.select %34, %35, %36 : vector<8x8xi1>, vector<8x8xf32>
    "tpu.trace_start"() <{level = 10 : i32, message = "hqd,hkd->hqk"}> : () -> ()
    %cst_6 = arith.constant dense<0.000000e+00> : vector<4x8x8xf32>
    %38 = tpu.matmul %13, %22, %cst_6 {dimension_numbers = #tpu.dot_dimension_numbers<[2], [2], [1], [1], [0, 0, 0, 1, 1, 1], [0], [0]>} : vector<4x8x8xbf16>, vector<4x8x8xbf16>, vector<4x8x8xf32> -> vector<4x8x8xf32>
    "tpu.trace_stop"() : () -> ()
    %cst_7 = arith.constant 0.176776692 : f32
    %39 = vector.broadcast %cst_7 : f32 to vector<4x8x8xf32>
    %40 = arith.mulf %38, %39 : vector<4x8x8xf32>
    %41 = vector.shape_cast %37 : vector<8x8xf32> to vector<1x8x8xf32>
    %42 = vector.broadcast %41 : vector<1x8x8xf32> to vector<4x8x8xf32>
    %43 = arith.addf %40, %42 : vector<4x8x8xf32>
    %cst_8 = arith.constant dense<0xFF800000> : vector<4x8xf32>
    %44 = vector.multi_reduction <maximumf>, %43, %cst_8 [2] : vector<4x8x8xf32> to vector<4x8xf32>
    %45 = vector.shape_cast %44 : vector<4x8xf32> to vector<4x8x1xf32>
    %46 = vector.broadcast %45 : vector<4x8x1xf32> to vector<4x8x8xf32>
    %47 = arith.subf %43, %46 : vector<4x8x8xf32>
    %48 = math.exp %47 : vector<4x8x8xf32>
    %cst_9 = arith.constant dense<0.000000e+00> : vector<4x8xf32>
    %49 = vector.multi_reduction <add>, %48, %cst_9 [2] : vector<4x8x8xf32> to vector<4x8xf32>
    %50 = vector.shape_cast %49 : vector<4x8xf32> to vector<4x8x1xf32>
    %51 = tpu.reciprocal %50 {approx = true} : vector<4x8x1xf32> -> vector<4x8x1xf32>
    %52 = vector.broadcast %51 : vector<4x8x1xf32> to vector<4x8x8xf32>
    %53 = arith.mulf %48, %52 : vector<4x8x8xf32>
    %54 = arith.truncf %53 : vector<4x8x8xf32> to vector<4x8x8xbf16>
    "tpu.trace_start"() <{level = 10 : i32, message = "hqk,hkd->hqd"}> : () -> ()
    %cst_10 = arith.constant dense<0.000000e+00> : vector<4x8x8xf32>
    %55 = tpu.matmul %54, %31, %cst_10 {dimension_numbers = #tpu.dot_dimension_numbers<[2], [1], [1], [2], [0, 0, 0, 1, 1, 2], [0], [0]>} : vector<4x8x8xbf16>, vector<4x8x8xbf16>, vector<4x8x8xf32> -> vector<4x8x8xf32>
    "tpu.trace_stop"() : () -> ()
    %56 = vector.extract_strided_slice %55 {offsets = [0, 0, 0], sizes = [1, 8, 8], strides = [1, 1, 1]} : vector<4x8x8xf32> to vector<1x8x8xf32>
    %57 = vector.shape_cast %56 : vector<1x8x8xf32> to vector<8x8xf32>
    %58 = vector.extract_strided_slice %55 {offsets = [1, 0, 0], sizes = [1, 8, 8], strides = [1, 1, 1]} : vector<4x8x8xf32> to vector<1x8x8xf32>
    %59 = vector.shape_cast %58 : vector<1x8x8xf32> to vector<8x8xf32>
    %60 = vector.extract_strided_slice %55 {offsets = [2, 0, 0], sizes = [1, 8, 8], strides = [1, 1, 1]} : vector<4x8x8xf32> to vector<1x8x8xf32>
    %61 = vector.shape_cast %60 : vector<1x8x8xf32> to vector<8x8xf32>
    %62 = vector.extract_strided_slice %55 {offsets = [3, 0, 0], sizes = [1, 8, 8], strides = [1, 1, 1]} : vector<4x8x8xf32> to vector<1x8x8xf32>
    %63 = vector.shape_cast %62 : vector<1x8x8xf32> to vector<8x8xf32>
    %64 = tpu.concatenate %57, %59, %61, %63 in 1 : vector<8x8xf32>, vector<8x8xf32>, vector<8x8xf32>, vector<8x8xf32> -> vector<8x32xf32>
    %65 = arith.truncf %64 : vector<8x32xf32> to vector<8x32xbf16>
    %c0_11 = arith.constant 0 : index
    %c0_12 = arith.constant 0 : index
    %66 = vector.load %arg3[%c0_11, %c0_12] : memref<32x32xbf16, #tpu.memory_space<vmem>>, vector<32x32xbf16>
    %cst_13 = arith.constant dense<0.000000e+00> : vector<8x32xf32>
    %67 = tpu.matmul %65, %66, %cst_13 {dimension_numbers = #tpu.dot_dimension_numbers<[1], [0], [0], [1], [0, 0, 1, 1], [], []>} : vector<8x32xbf16>, vector<32x32xbf16>, vector<8x32xf32> -> vector<8x32xf32>
    %c0_14 = arith.constant 0 : index
    %c0_15 = arith.constant 0 : index
    %68 = vector.load %arg4[%c0_14, %c0_15] : memref<1x32xf32, #tpu.memory_space<vmem>>, vector<1x32xf32>
    %69 = vector.broadcast %68 : vector<1x32xf32> to vector<8x32xf32>
    %70 = arith.addf %67, %69 : vector<8x32xf32>
    %c0_16 = arith.constant 0 : index
    %c0_17 = arith.constant 0 : index
    %c0_18 = arith.constant 0 : index
    %71 = vector.load %arg5[%c0_16, %c0_17, %c0_18] : memref<1x8x32xf32, #tpu.memory_space<vmem>>, vector<1x8x32xf32>
    %72 = vector.shape_cast %71 : vector<1x8x32xf32> to vector<8x32xf32>
    %73 = vector.shape_cast %70 : vector<8x32xf32> to vector<1x8x32xf32>
    tpu.vector_store %arg5[%c0_16, %c0_17, %c0_18], %73 {strides = array<i32>} : memref<1x8x32xf32, #tpu.memory_space<vmem>>, vector<1x8x32xf32>,
    return
  }
  func.func @transform_0(%arg0: i32) -> (i32, i32, i32) {
    %c0_i32 = arith.constant 0 : i32
    %c0_i32_0 = arith.constant 0 : i32
    %c0_i32_1 = arith.constant 0 : i32
    return %arg0, %c0_i32, %c0_i32_0 : i32, i32, i32
  }
  func.func @transform_1(%arg0: i32) -> (i32, i32) {
    %c0_i32 = arith.constant 0 : i32
    %c0_i32_0 = arith.constant 0 : i32
    %c0_i32_1 = arith.constant 0 : i32
    return %c0_i32, %c0_i32_0 : i32, i32
  }
  func.func @transform_2(%arg0: i32) -> (i32, i32) {
    %c0_i32 = arith.constant 0 : i32
    %c0_i32_0 = arith.constant 0 : i32
    %c0_i32_1 = arith.constant 0 : i32
    return %c0_i32, %c0_i32_0 : i32, i32
  }
  func.func @transform_3(%arg0: i32) -> (i32, i32) {
    %c0_i32 = arith.constant 0 : i32
    %c0_i32_0 = arith.constant 0 : i32
    %c0_i32_1 = arith.constant 0 : i32
    return %c0_i32, %c0_i32_0 : i32, i32
  }
  func.func @transform_4(%arg0: i32) -> (i32, i32, i32) {
    %c0_i32 = arith.constant 0 : i32
    %c0_i32_0 = arith.constant 0 : i32
    %c0_i32_1 = arith.constant 0 : i32
    return %arg0, %c0_i32, %c0_i32_0 : i32, i32, i32
  }
}

</mosaic_0001>

<llo_original>
// kernel: tpu_custom_call.1
$region0: #{tpu_custom_call.1}
  #allocation0 [shape = 'u32[]', space=smem, size = 0x4, offset = 0x4, fixed_abs, tag = 'smem constant byte address 0x4 - core index']
  #allocation1 [shape = 'u32[72,128]{1,0:T(1,128)}', space=vmem, size = 0x9000, scoped, tag = 'internal scratch']
  %s0 = inlined_call_operand.hbm [shape: bf16[2,8,32], index: 0, kind: input, shape index: {}]
  %s1 = inlined_call_operand.hbm [shape: bf16[32,96], index: 1, kind: input, shape index: {}]
  %s2 = inlined_call_operand.hbm [shape: bf16[32,32], index: 2, kind: input, shape index: {}]
  %s3 = inlined_call_operand.vmem [shape: f32[1,32], index: 3, kind: input, shape index: {}]
  %s4 = inlined_call_operand.hbm [shape: f32[2,8,32], index: 4, kind: output, shape index: {}]
  %s5 = sld [smem:[#allocation0]]
  $region61: #{tpu_custom_call.1} parent=0
    _
  %s7 = ssub.s32 1, %s5
  %s8 = scalar_select 0, %s7, %s5
  $region1: #{tpu_custom_call.1} parent=0
    #allocation2 [shape = 'u8[4096]{0}', space=vmem, size = 0x1000, scoped, tag = 'input window, operand 0']
    #allocation3 [shape = 's32[2]{0}', space=sflag, size = 0x8, scoped, tag = 'scoped memory for tpu_custom_call.1']
    #allocation4 [shape = 's32[2]{0}', space=sflag, size = 0x8, scoped, tag = 'scoped memory for tpu_custom_call.1']
    #allocation5 [shape = 'u8[8192]{0}', space=vmem, size = 0x2000, scoped, tag = 'input window, operand 1, single buffered']
    #allocation6 [shape = 's32[1]{0}', space=sflag, size = 0x4, scoped, tag = 'scoped memory for tpu_custom_call.1']
    #allocation7 [shape = 'u8[8192]{0}', space=vmem, size = 0x2000, scoped, tag = 'input window, operand 2, single buffered']
    #allocation8 [shape = 'u8[8192]{0}', space=vmem, size = 0x2000, scoped, tag = 'output window, operand 0']
    %9 = vsyncpa [#allocation3], 0
    %s10 = scalar_lea.sflag [#allocation3], 1
    %11 = vsyncpa %s10, 0
    %12 = vsyncpa [#allocation6], 0
    %13 = vsyncpa [#allocation4], 0
    %s14 = scalar_lea.sflag [#allocation4], 1
    %15 = vsyncpa %s14, 0
    loop: start=0, step=1, limit=4
    $region2: #{tpu_custom_call.1} parent=1 // loop_pre_header
      _
    $region3: #{tpu_custom_call.1} parent=1 // loop_header
      %s17 = sphi 0, %s21
      %p18 = scmp.ge.s32.totalorder %s17, 4
      %s27 = sphi 0, %s29
      %s30 = sphi 0, %s27
      %s31 = sphi 0, %s30
      %s47 = sphi 0, %s31
      %s51 = sphi 0, %s51
      %s53 = sphi 0, %s51
      %s54 = sphi 0, %s53
      %s68 = sphi 0, %s54
      %s72 = sphi 0, %s72
      %s74 = sphi 0, %s72
      %s75 = sphi 0, %s74
      %s89 = sphi 0, %s75
      %s93 = sphi 0, %s93
      %s95 = sphi 0, %s93
      %s96 = sphi 0, %s95
      %s110 = sphi 0, %s96
      %s116 = sphi 0, %s118
      %s119 = sphi 0, %s116
      %s120 = sphi 0, %s119
      %s136 = sphi 0, %s120
    $region4: #{tpu_custom_call.1} parent=1 // loop_header_branch
      %20 = sbr.rel (%p18) target = $region8
    $region5: #{tpu_custom_call.1} parent=1 // loop_body
      %s22 = ssub.s32 %s17, 1
      %s23 = ssub.s32 %s17, 2
      %s24 = sadd.s32 %s17, 1
      %s25 = ssub.s32 %s17, %s24
      %p26 = scmp.eq.s32.totalorder %s25, 0
      %s28 = sadd.s32 %s27, 1
      %s29 = scalar_select %p26, %s27, %s28
      %p32 = pneg %p26
      %p33 = scmp.eq.s32.totalorder %s17, 1
      %p34 = por %p32, %p33
      %p35 = scmp.ne.s32.totalorder %s27, %s30
      %p36 = scmp.eq.s32.totalorder %s17, 0
      %p37 = por %p35, %p36
      %p38 = scmp.ne.s32.totalorder %s27, %s30
      %p39 = scmp.eq.s32.totalorder %s22, 1
      %p40 = por %p38, %p39
      %p41 = scmp.ne.s32.totalorder %s30, %s31
      %p42 = scmp.eq.s32.totalorder %s22, 0
      %p43 = por %p41, %p42
      %p44 = scmp.ne.s32.totalorder %s30, %s31
      %p45 = scmp.eq.s32.totalorder %s23, 1
      %p46 = por %p44, %p45
      %p48 = scmp.ne.s32.totalorder %s31, %s47
      %p49 = scmp.eq.s32.totalorder %s23, 0
      %p50 = por %p48, %p49
      %s52 = sadd.s32 %s51, 1
      %p55 = scmp.eq.s32.totalorder %s17, 1
      %p56 = scmp.ne.s32.totalorder %s51, %s53
      %p57 = scmp.eq.s32.totalorder %s17, 0
      %p58 = por %p56, %p57
      %p59 = scmp.ne.s32.totalorder %s51, %s53
      %p60 = scmp.eq.s32.totalorder %s22, 1
      %p61 = por %p59, %p60
      %p62 = scmp.ne.s32.totalorder %s53, %s54
      %p63 = scmp.eq.s32.totalorder %s22, 0
      %p64 = por %p62, %p63
      %p65 = scmp.ne.s32.totalorder %s53, %s54
      %p66 = scmp.eq.s32.totalorder %s23, 1
      %p67 = por %p65, %p66
      %p69 = scmp.ne.s32.totalorder %s54, %s68
      %p70 = scmp.eq.s32.totalorder %s23, 0
      %p71 = por %p69, %p70
      %s73 = sadd.s32 %s72, 1
      %p76 = scmp.eq.s32.totalorder %s17, 1
      %p77 = scmp.ne.s32.totalorder %s72, %s74
      %p78 = scmp.eq.s32.totalorder %s17, 0
      %p79 = por %p77, %p78
      %p80 = scmp.ne.s32.totalorder %s72, %s74
      %p81 = scmp.eq.s32.totalorder %s22, 1
      %p82 = por %p80, %p81
      %p83 = scmp.ne.s32.totalorder %s74, %s75
      %p84 = scmp.eq.s32.totalorder %s22, 0
      %p85 = por %p83, %p84
      %p86 = scmp.ne.s32.totalorder %s74, %s75
      %p87 = scmp.eq.s32.totalorder %s23, 1
      %p88 = por %p86, %p87
      %p90 = scmp.ne.s32.totalorder %s75, %s89
      %p91 = scmp.eq.s32.totalorder %s23, 0
      %p92 = por %p90, %p91
      %s94 = sadd.s32 %s93, 1
      %p97 = scmp.eq.s32.totalorder %s17, 1
      %p98 = scmp.ne.s32.totalorder %s93, %s95
      %p99 = scmp.eq.s32.totalorder %s17, 0
      %p100 = por %p98, %p99
      %p101 = scmp.ne.s32.totalorder %s93, %s95
      %p102 = scmp.eq.s32.totalorder %s22, 1
      %p103 = por %p101, %p102
      %p104 = scmp.ne.s32.totalorder %s95, %s96
      %p105 = scmp.eq.s32.totalorder %s22, 0
      %p106 = por %p104, %p105
      %p107 = scmp.ne.s32.totalorder %s95, %s96
      %p108 = scmp.eq.s32.totalorder %s23, 1
      %p109 = por %p107, %p108
      %p111 = scmp.ne.s32.totalorder %s96, %s110
      %p112 = scmp.eq.s32.totalorder %s23, 0
      %p113 = por %p111, %p112
      %s114 = ssub.s32 %s17, %s24
      %p115 = scmp.eq.s32.totalorder %s114, 0
      %s117 = sadd.s32 %s116, 1
      %s118 = scalar_select %p115, %s116, %s117
      %p121 = pneg %p115
      %p122 = scmp.eq.s32.totalorder %s17, 1
      %p123 = por %p121, %p122
      %p124 = scmp.ne.s32.totalorder %s116, %s119
      %p125 = scmp.eq.s32.totalorder %s17, 0
      %p126 = por %p124, %p125
      %p127 = scmp.ne.s32.totalorder %s116, %s119
      %p128 = scmp.eq.s32.totalorder %s22, 1
      %p129 = por %p127, %p128
      %p130 = scmp.ne.s32.totalorder %s119, %s120
      %p131 = scmp.eq.s32.totalorder %s22, 0
      %p132 = por %p130, %p131
      %p133 = scmp.ne.s32.totalorder %s119, %s120
      %p134 = scmp.eq.s32.totalorder %s23, 1
      %p135 = por %p133, %p134
      %p137 = scmp.ne.s32.totalorder %s120, %s136
      %p138 = scmp.eq.s32.totalorder %s23, 0
      %p139 = por %p137, %p138
      %p140 = scmp.le.s32.totalorder 1, %s17
      %p141 = scmp.lt.s32.totalorder %s17, 3
      %p142 = pnand %p140, %p141
      %p143 = pneg %p142
      // Predicated region
      $region9: #{tpu_custom_call.1} parent=5 // pred_check
        _
      $region10: #{tpu_custom_call.1} parent=5 // pred_check_branch
        %145 = sbr.rel (%p142) target = $region12
      $region11: #{tpu_custom_call.1} parent=5 // pred_region
        %s146 = ssub.s32 %s17, 1
        // Predicated region
        $region13: #{tpu_custom_call.1} parent=11 // pred_check
          %p147 = pneg %p64
        $region14: #{tpu_custom_call.1} parent=11 // pred_check_branch
          %149 = sbr.rel (%p147) target = $region16
        $region15: #{tpu_custom_call.1} parent=11 // pred_region
          %151 = vsyncadd [#allocation6], 0
          %s152 = sshll.u32 %s1, 4
          %s153 = int_to_ptr.hbm [resolvable:$true] %s152
          %s154 = sshll.u32 [#allocation5], 4
          %s155 = int_to_ptr.vmem [resolvable:$true] %s154
          %160 = dma.hbm_to_vmem [thread:$0]  %s153, 256, %s155, [#allocation6], 64, 64, 4
        $region16: #{tpu_custom_call.1} parent=11 // pred_fallthru
          _
        // Predicated region
        $region17: #{tpu_custom_call.1} parent=11 // pred_check
          %p161 = pneg %p85
        $region18: #{tpu_custom_call.1} parent=11 // pred_check_branch
          %163 = sbr.rel (%p161) target = $region20
        $region19: #{tpu_custom_call.1} parent=11 // pred_region
          %165 = vsyncadd [#allocation6], 0
          %s166 = sshll.u32 %s2, 4
          %s167 = int_to_ptr.hbm [resolvable:$true] %s166
          %s168 = sshll.u32 [#allocation7], 4
          %s169 = int_to_ptr.vmem [resolvable:$true] %s168
          %174 = dma.hbm_to_vmem [thread:$0]  %s167, 256, %s169, [#allocation6], 64, 64, 4
        $region20: #{tpu_custom_call.1} parent=11 // pred_fallthru
          _
        // Predicated region
        $region21: #{tpu_custom_call.1} parent=11 // pred_check
          %p175 = pneg %p106
        $region22: #{tpu_custom_call.1} parent=11 // pred_check_branch
          %177 = sbr.rel (%p175) target = $region24
        $region23: #{tpu_custom_call.1} parent=11 // pred_region
          _
        $region24: #{tpu_custom_call.1} parent=11 // pred_fallthru
          _
      $region12: #{tpu_custom_call.1} parent=5 // pred_fallthru
        _
      %p178 = scmp.lt.s32.totalorder %s17, 2
      // Predicated region
      $region25: #{tpu_custom_call.1} parent=5 // pred_check
        %p179 = pneg %p178
      $region26: #{tpu_custom_call.1} parent=5 // pred_check_branch
        %181 = sbr.rel (%p179) target = $region28
      $region27: #{tpu_custom_call.1} parent=5 // pred_region
        // Predicated region
        $region29: #{tpu_custom_call.1} parent=27 // pred_check
          %p182 = pneg %p37
        $region30: #{tpu_custom_call.1} parent=27 // pred_check_branch
          %184 = sbr.rel (%p182) target = $region32
        $region31: #{tpu_custom_call.1} parent=27 // pred_region
          %s185 = sand.u32 %s27, 1
          %s186 = scalar_lea.sflag [#allocation3], %s185
          %s187 = sand.u32 %s27, 1
          %s188 = smul.addr %s187, 4
          %s189 = scalar_lea.vmem [#allocation2], %s188
          %191 = vsyncadd %s186, 0
          %s192 = smul.addr %s17, 4
          %s193 = scalar_lea.hbm %s0, %s192
          %s195 = sshll.u32 %s193, 4
          %s196 = int_to_ptr.hbm [resolvable:$true] %s195
          %s197 = sshll.u32 %s189, 4
          %s198 = int_to_ptr.vmem [resolvable:$true] %s197
          %200 = dma.hbm_to_vmem [thread:$0]  %s196, 64, %s198, %s186
        $region32: #{tpu_custom_call.1} parent=27 // pred_fallthru
          _
      $region28: #{tpu_custom_call.1} parent=5 // pred_fallthru
        _
      %p201 = scmp.le.s32.totalorder 1, %s17
      %p202 = scmp.lt.s32.totalorder %s17, 3
      %p203 = pnand %p201, %p202
      %p204 = pneg %p203
      // Predicated region
      $region33: #{tpu_custom_call.1} parent=5 // pred_check
        _
      $region34: #{tpu_custom_call.1} parent=5 // pred_check_branch
        %206 = sbr.rel (%p203) target = $region36
      $region35: #{tpu_custom_call.1} parent=5 // pred_region
        %s207 = ssub.s32 %s17, 1
        %s208 = sand.u32 %s30, 1
        %s209 = scalar_lea.sflag [#allocation3], %s208
        %s210 = sand.u32 %s30, 1
        %s211 = smul.addr %s210, 4
        %s212 = scalar_lea.vmem [#allocation2], %s211
        // Predicated region
        $region37: #{tpu_custom_call.1} parent=35 // pred_check
          %p213 = pneg %p43
        $region38: #{tpu_custom_call.1} parent=35 // pred_check_branch
          %215 = sbr.rel (%p213) target = $region40
        $region39: #{tpu_custom_call.1} parent=35 // pred_region
          %217 = dma.done %s209, 64
        $region40: #{tpu_custom_call.1} parent=35 // pred_fallthru
          _
        // Predicated region
        $region41: #{tpu_custom_call.1} parent=35 // pred_check
          %p218 = pneg %p64
        $region42: #{tpu_custom_call.1} parent=35 // pred_check_branch
          %220 = sbr.rel (%p218) target = $region44
        $region43: #{tpu_custom_call.1} parent=35 // pred_region
          %222 = dma.done [#allocation6], 256
        $region44: #{tpu_custom_call.1} parent=35 // pred_fallthru
          _
        // Predicated region
        $region45: #{tpu_custom_call.1} parent=35 // pred_check
          %p223 = pneg %p85
        $region46: #{tpu_custom_call.1} parent=35 // pred_check_branch
          %225 = sbr.rel (%p223) target = $region48
        $region47: #{tpu_custom_call.1} parent=35 // pred_region
          %227 = dma.done [#allocation6], 256
        $region48: #{tpu_custom_call.1} parent=35 // pred_fallthru
          _
        %s228 = sand.u32 %s30, 1
        %s229 = scalar_lea.sflag [#allocation3], %s228
        %s230 = sand.u32 %s30, 1
        %s231 = smul.addr %s230, 4
        %s232 = scalar_lea.vmem [#allocation2], %s231
        %p233 = pneg %p43
        %p234 = pneg %p40
        %p235 = pneg %p64
        %p236 = pneg %p61
        %p237 = pneg %p85
        %p238 = pneg %p82
        %p239 = pneg %p106
        %p240 = pneg %p103
        %p241 = pneg %p132
        %p242 = pneg %p129
        %s243 = sand.u32 %s119, 1
        %s244 = scalar_lea.sflag [#allocation4], %s243
        %s245 = sand.u32 %s119, 1
        %s246 = smul.addr %s245, 8
        %s247 = scalar_lea.vmem [#allocation8], %s246
        %v249 = vld [vmem:[%s212] sm:$0xf]
        %v250 = vld [vmem:[#allocation5] sm:$0xf]
        %v251 = vld [vmem:[#allocation5 + $0x4] sm:$0xf]
        %v252 = vld [vmem:[#allocation5 + $0x8] sm:$0xf]
        %v253 = vld [vmem:[#allocation5 + $0xc] sm:$0xf]
        %v258 = vunpack.c.l.b16 %v250
        %v259 = vunpack.c.l.b16 %v251
        %v260 = vunpack.c.l.b16 %v252
        %v261 = vunpack.c.l.b16 %v253
        %v262 = vpack.c.b16 %v259, %v258
        %v263 = vpack.c.b16 %v261, %v260
        %vm266 = vcmask 261120
        %v268 = vsel %vm266, %v249, 0
        %270 = vmatpush.bf16.msra.mxu0 0
        %271 = vmatpush.bf16.msra.mxu0 0
        %272 = vmatpush.bf16.msra.mxu0 0
        %273 = vmatpush.bf16.msra.mxu0 0
        %274 = vmatpush.bf16.msra.mxu0 0
        %275 = vmatpush.bf16.msra.mxu0 0
        %276 = vmatpush.bf16.msra.mxu0 %v263
        %277 = vmatpush.bf16.msra.mxu0 %v262
        %278 = vmatmul.bf16.gmra.mxu0 %v268
        %v279 = vpop.f32.mrf.mxu0
        %v280 = vadd.f32 0.0, %v279
        %v281 = vpop.f32.mrf.mxu0
        %282 = vdwg.mxu0
        %v283 = vpack.c.bf16 %v280, %v280
        %285 = vrot.lane.b32.xlu0 %v283, 120
        %v286 = vpop.permute.xlu0 %285
        %287 = vrot.lane.b32.xlu0 %v283, 112
        %v288 = vpop.permute.xlu0 %287
        %289 = vrot.lane.b32.xlu0 %v283, 104
        %v290 = vpop.permute.xlu0 %289
        %v291 = vlaneseq
        %v292 = vshrl.u32 %v291, 7
        %v293 = vlaneseq
        %v294 = vand.u32 %v293, 127
        %vm295 = vcmp.ge.s32.totalorder %v292, %v294
        %v296 = vsel %vm295, 0.0, -inf
        %v297 = vunpack.c.l.b16 %v283
        %v298 = vpack.c.b16 %v297, %v297
        %299 = vrot.lane.b32.xlu0 %v298, 96
        %v300 = vpop.permute.xlu0 %299
        %vm301 = vcmask 64512
        %v303 = vsel %vm301, %v283, 0
        %v306 = vsel %vm301, %v300, 0
        %308 = vmatpush.bf16.xpose.msra.mxu0 0
        %309 = vmatpush.bf16.xpose.msra.mxu0 0
        %310 = vmatpush.bf16.xpose.msra.mxu0 0
        %311 = vmatpush.bf16.xpose.msra.mxu0 0
        %312 = vmatpush.bf16.xpose.msra.mxu0 0
        %313 = vmatpush.bf16.xpose.msra.mxu0 0
        %314 = vmatpush.bf16.xpose.msra.mxu0 0
        %315 = vmatpush.bf16.xpose.msra.mxu0 %v306
        %316 = vmatmul.bf16.gmra.mxu0 %v303
        %v317 = vpop.f32.mrf.mxu0
        %v318 = vadd.f32 0.0, %v317
        %v319 = vpop.f32.mrf.mxu0
        %320 = vdwg.mxu0
        %v321 = vunpack.c.l.b16 %v286
        %v322 = vpack.c.b16 %v321, %v321
        %323 = vrot.lane.b32.xlu0 %v322, 96
        %v324 = vpop.permute.xlu0 %323
        %v326 = vsel %vm301, %v286, 0
        %v329 = vsel %vm301, %v324, 0
        %331 = vmatpush.bf16.xpose.msra.mxu0 0
        %332 = vmatpush.bf16.xpose.msra.mxu0 0
        %333 = vmatpush.bf16.xpose.msra.mxu0 0
        %334 = vmatpush.bf16.xpose.msra.mxu0 0
        %335 = vmatpush.bf16.xpose.msra.mxu0 0
        %336 = vmatpush.bf16.xpose.msra.mxu0 0
        %337 = vmatpush.bf16.xpose.msra.mxu0 0
        %338 = vmatpush.bf16.xpose.msra.mxu0 %v329
        %339 = vmatmul.bf16.gmra.mxu0 %v326
        %v340 = vpop.f32.mrf.mxu0
        %v341 = vadd.f32 0.0, %v340
        %v342 = vpop.f32.mrf.mxu0
        %343 = vdwg.mxu0
        %v344 = vunpack.c.l.b16 %v288
        %v345 = vpack.c.b16 %v344, %v344
        %346 = vrot.lane.b32.xlu0 %v345, 96
        %v347 = vpop.permute.xlu0 %346
        %v349 = vsel %vm301, %v288, 0
        %v352 = vsel %vm301, %v347, 0
        %354 = vmatpush.bf16.xpose.msra.mxu0 0
        %355 = vmatpush.bf16.xpose.msra.mxu0 0
        %356 = vmatpush.bf16.xpose.msra.mxu0 0
        %357 = vmatpush.bf16.xpose.msra.mxu0 0
        %358 = vmatpush.bf16.xpose.msra.mxu0 0
        %359 = vmatpush.bf16.xpose.msra.mxu0 0
        %360 = vmatpush.bf16.xpose.msra.mxu0 0
        %361 = vmatpush.bf16.xpose.msra.mxu0 %v352
        %362 = vmatmul.bf16.gmra.mxu0 %v349
        %v363 = vpop.f32.mrf.mxu0
        %v364 = vadd.f32 0.0, %v363
        %v365 = vpop.f32.mrf.mxu0
        %366 = vdwg.mxu0
        %v367 = vunpack.c.l.b16 %v290
        %v368 = vpack.c.b16 %v367, %v367
        %369 = vrot.lane.b32.xlu0 %v368, 96
        %v370 = vpop.permute.xlu0 %369
        %v372 = vsel %vm301, %v290, 0
        %v375 = vsel %vm301, %v370, 0
        %377 = vmatpush.bf16.xpose.msra.mxu0 0
        %378 = vmatpush.bf16.xpose.msra.mxu0 0
        %379 = vmatpush.bf16.xpose.msra.mxu0 0
        %380 = vmatpush.bf16.xpose.msra.mxu0 0
        %381 = vmatpush.bf16.xpose.msra.mxu0 0
        %382 = vmatpush.bf16.xpose.msra.mxu0 0
        %383 = vmatpush.bf16.xpose.msra.mxu0 0
        %384 = vmatpush.bf16.xpose.msra.mxu0 %v375
        %385 = vmatmul.bf16.gmra.mxu0 %v372
        %v386 = vpop.f32.mrf.mxu0
        %v387 = vadd.f32 0.0, %v386
        %v388 = vpop.f32.mrf.mxu0
        %389 = vdwg.mxu0
        %v390 = vmul.f32 %v318, 0.17677669
        %v391 = vmul.f32 %v341, 0.17677669
        %v392 = vmul.f32 %v364, 0.17677669
        %v393 = vmul.f32 %v387, 0.17677669
        %v394 = vadd.f32 %v390, %v296
        %v395 = vadd.f32 %v391, %v296
        %v396 = vadd.f32 %v392, %v296
        %v397 = vadd.f32 %v393, %v296
        %v398 = vsel %vm301, %v394, -inf
        %399 = vmax.xlane.f32.xlu0 %v398
        %v400 = vpop.xlane.xlu0 %399
        %v401 = vsel %vm301, %v395, -inf
        %402 = vmax.xlane.f32.xlu0 %v401
        %v403 = vpop.xlane.xlu0 %402
        %v404 = vsel %vm301, %v396, -inf
        %405 = vmax.xlane.f32.xlu0 %v404
        %v406 = vpop.xlane.xlu0 %405
        %v407 = vsel %vm301, %v397, -inf
        %408 = vmax.xlane.f32.xlu0 %v407
        %v409 = vpop.xlane.xlu0 %408
        %v410 = vsub.f32 %v394, %v400
        %v411 = vsub.f32 %v395, %v403
        %v412 = vsub.f32 %v396, %v406
        %v413 = vsub.f32 %v397, %v409
        %v414 = vmul.f32 %v410, 1.442695
        %v415 = vpow.pop %v414
        %v416 = vmul.f32 %v411, 1.442695
        %v417 = vpow.pop %v416
        %v418 = vmul.f32 %v412, 1.442695
        %v419 = vpow.pop %v418
        %v420 = vmul.f32 %v413, 1.442695
        %v421 = vpow.pop %v420
        %v422 = vsel %vm301, %v415, 0.0
        %423 = vadd.xlane.f32.xlu0 %v422
        %v424 = vpop.xlane.xlu0 %423
        %v425 = vsel %vm301, %v417, 0.0
        %426 = vadd.xlane.f32.xlu0 %v425
        %v427 = vpop.xlane.xlu0 %426
        %v428 = vsel %vm301, %v419, 0.0
        %429 = vadd.xlane.f32.xlu0 %v428
        %v430 = vpop.xlane.xlu0 %429
        %v431 = vsel %vm301, %v421, 0.0
        %432 = vadd.xlane.f32.xlu0 %v431
        %v433 = vpop.xlane.xlu0 %432
        %v434 = vrcp.pop %v424
        %v435 = vrcp.pop %v427
        %v436 = vrcp.pop %v430
        %v437 = vrcp.pop %v433
        %v438 = vmul.f32 %v415, %v434
        %v439 = vmul.f32 %v417, %v435
        %v440 = vmul.f32 %v419, %v436
        %v441 = vmul.f32 %v421, %v437
        %v442 = vpack.c.bf16 %v438, %v438
        %v443 = vpack.c.bf16 %v439, %v439
        %v444 = vpack.c.bf16 %v440, %v440
        %v445 = vpack.c.bf16 %v441, %v441
        %446 = vrot.lane.b32.xlu0 %v298, 64
        %v447 = vpop.permute.xlu0 %446
        %v449 = vsel %vm301, %v442, 0
        %vm451 = vcmask 1043456
        %v453 = vsel %vm451, %v447, 0
        %455 = vmatpush.bf16.msra.mxu0 0
        %456 = vmatpush.bf16.msra.mxu0 0
        %457 = vmatpush.bf16.msra.mxu0 0
        %458 = vmatpush.bf16.msra.mxu0 0
        %459 = vmatpush.bf16.msra.mxu0 0
        %460 = vmatpush.bf16.msra.mxu0 0
        %461 = vmatpush.bf16.msra.mxu0 0
        %462 = vmatpush.bf16.msra.mxu0 %v453
        %463 = vmatmul.bf16.gmra.mxu0 %v449
        %v464 = vpop.f32.mrf.mxu0
        %v465 = vadd.f32 0.0, %v464
        %v466 = vpop.f32.mrf.mxu0
        %467 = vdwg.mxu0
        %468 = vrot.lane.b32.xlu0 %v322, 64
        %v469 = vpop.permute.xlu0 %468
        %v471 = vsel %vm301, %v443, 0
        %v474 = vsel %vm451, %v469, 0
        %476 = vmatpush.bf16.msra.mxu0 0
        %477 = vmatpush.bf16.msra.mxu0 0
        %478 = vmatpush.bf16.msra.mxu0 0
        %479 = vmatpush.bf16.msra.mxu0 0
        %480 = vmatpush.bf16.msra.mxu0 0
        %481 = vmatpush.bf16.msra.mxu0 0
        %482 = vmatpush.bf16.msra.mxu0 0
        %483 = vmatpush.bf16.msra.mxu0 %v474
        %484 = vmatmul.bf16.gmra.mxu0 %v471
        %v485 = vpop.f32.mrf.mxu0
        %v486 = vadd.f32 0.0, %v485
        %v487 = vpop.f32.mrf.mxu0
        %488 = vdwg.mxu0
        %489 = vrot.lane.b32.xlu0 %v345, 64
        %v490 = vpop.permute.xlu0 %489
        %v492 = vsel %vm301, %v444, 0
        %v495 = vsel %vm451, %v490, 0
        %497 = vmatpush.bf16.msra.mxu0 0
        %498 = vmatpush.bf16.msra.mxu0 0
        %499 = vmatpush.bf16.msra.mxu0 0
        %500 = vmatpush.bf16.msra.mxu0 0
        %501 = vmatpush.bf16.msra.mxu0 0
        %502 = vmatpush.bf16.msra.mxu0 0
        %503 = vmatpush.bf16.msra.mxu0 0
        %504 = vmatpush.bf16.msra.mxu0 %v495
        %505 = vmatmul.bf16.gmra.mxu0 %v492
        %v506 = vpop.f32.mrf.mxu0
        %v507 = vadd.f32 0.0, %v506
        %v508 = vpop.f32.mrf.mxu0
        %509 = vdwg.mxu0
        %510 = vrot.lane.b32.xlu0 %v368, 64
        %v511 = vpop.permute.xlu0 %510
        %v513 = vsel %vm301, %v445, 0
        %v516 = vsel %vm451, %v511, 0
        %518 = vmatpush.bf16.msra.mxu0 0
        %519 = vmatpush.bf16.msra.mxu0 0
        %520 = vmatpush.bf16.msra.mxu0 0
        %521 = vmatpush.bf16.msra.mxu0 0
        %522 = vmatpush.bf16.msra.mxu0 0
        %523 = vmatpush.bf16.msra.mxu0 0
        %524 = vmatpush.bf16.msra.mxu0 0
        %525 = vmatpush.bf16.msra.mxu0 %v516
        %526 = vmatmul.bf16.gmra.mxu0 %v513
        %v527 = vpop.f32.mrf.mxu0
        %v528 = vadd.f32 0.0, %v527
        %v529 = vpop.f32.mrf.mxu0
        %530 = vdwg.mxu0
        %532 = vrot.lane.b32.xlu0 %v486, 8
        %v533 = vpop.permute.xlu0 %532
        %536 = vrot.lane.b32.xlu0 %v507, 16
        %v537 = vpop.permute.xlu0 %536
        %540 = vrot.lane.b32.xlu0 %v528, 24
        %v541 = vpop.permute.xlu0 %540
        %v543 = vsel %vm301, %v465, %v533
        %vm544 = vcmask 130048
        %v545 = vsel %vm544, %v543, %v537
        %vm546 = vcmask 195584
        %v547 = vsel %vm546, %v545, %v541
        %v548 = vpack.c.bf16 %v547, %v547
        %v549 = vld [vmem:[#allocation7] sm:$0xf]
        %v550 = vld [vmem:[#allocation7 + $0x4] sm:$0xf]
        %v551 = vld [vmem:[#allocation7 + $0x8] sm:$0xf]
        %v552 = vld [vmem:[#allocation7 + $0xc] sm:$0xf]
        %v553 = vld [vmem:[%s3] sm:$0x1]
        %v555 = vperm.slane %v553, 0
        %v561 = vunpack.c.l.b16 %v549
        %v562 = vunpack.c.l.b16 %v550
        %v563 = vunpack.c.l.b16 %v551
        %v564 = vunpack.c.l.b16 %v552
        %v565 = vpack.c.b16 %v562, %v561
        %v566 = vpack.c.b16 %v564, %v563
        %v570 = vsel %vm266, %v548, 0
        %572 = vmatpush.bf16.msra.mxu0 0
        %573 = vmatpush.bf16.msra.mxu0 0
        %574 = vmatpush.bf16.msra.mxu0 0
        %575 = vmatpush.bf16.msra.mxu0 0
        %576 = vmatpush.bf16.msra.mxu0 0
        %577 = vmatpush.bf16.msra.mxu0 0
        %578 = vmatpush.bf16.msra.mxu0 %v566
        %579 = vmatpush.bf16.msra.mxu0 %v565
        %580 = vmatmul.bf16.gmra.mxu0 %v570
        %v581 = vpop.f32.mrf.mxu0
        %v582 = vadd.f32 %v555, %v581
        %v583 = vpop.f32.mrf.mxu0
        %584 = vdwg.mxu0
        %585 = vst.msk [vmem:[%s247] sm:$0xff] %vm266, %v582
        %s586 = sand.u32 %s119, 1
        %s587 = scalar_lea.sflag [#allocation4], %s586
        %s588 = sand.u32 %s119, 1
        %s589 = smul.addr %s588, 8
        %s590 = scalar_lea.vmem [#allocation8], %s589
        // Predicated region
        $region49: #{tpu_custom_call.1} parent=35 // pred_check
          %p591 = pneg %p129
        $region50: #{tpu_custom_call.1} parent=35 // pred_check_branch
          %593 = sbr.rel (%p591) target = $region52
        $region51: #{tpu_custom_call.1} parent=35 // pred_region
          %595 = vsyncadd %s587, 0
          %s596 = smul.addr %s22, 8
          %s597 = scalar_lea.hbm %s4, %s596
          %s599 = sshll.u32 %s590, 4
          %s600 = int_to_ptr.vmem [resolvable:$true] %s599
          %s601 = sshll.u32 %s597, 4
          %s602 = int_to_ptr.hbm [resolvable:$true] %s601
          %604 = dma.vmem_to_hbm [thread:$0]  %s600, 128, %s602, %s587
        $region52: #{tpu_custom_call.1} parent=35 // pred_fallthru
          _
      $region36: #{tpu_custom_call.1} parent=5 // pred_fallthru
        _
      %p605 = scmp.le.s32.totalorder 2, %s17
      // Predicated region
      $region53: #{tpu_custom_call.1} parent=5 // pred_check
        %p606 = pneg %p605
      $region54: #{tpu_custom_call.1} parent=5 // pred_check_branch
        %608 = sbr.rel (%p606) target = $region56
      $region55: #{tpu_custom_call.1} parent=5 // pred_region
        %s609 = ssub.s32 %s17, 2
        // Predicated region
        $region57: #{tpu_custom_call.1} parent=55 // pred_check
          %p610 = pneg %p135
        $region58: #{tpu_custom_call.1} parent=55 // pred_check_branch
          %612 = sbr.rel (%p610) target = $region60
        $region59: #{tpu_custom_call.1} parent=55 // pred_region
          %s613 = sand.u32 %s120, 1
          %s614 = scalar_lea.sflag [#allocation4], %s613
          %s615 = sand.u32 %s120, 1
          %s616 = smul.addr %s615, 8
          %s617 = scalar_lea.vmem [#allocation8], %s616
          %619 = dma.done %s614, 128
        $region60: #{tpu_custom_call.1} parent=55 // pred_fallthru
          _
      $region56: #{tpu_custom_call.1} parent=5 // pred_fallthru
        _
    $region6: #{tpu_custom_call.1} parent=1 // loop_footer
      %s21 = sadd.s32 1, %s17
    $region7: #{tpu_custom_call.1} parent=1 // loop_footer_branch
      %16 = sbr.rel target = $region3
    $region8: #{tpu_custom_call.1} parent=1 // loop_exit
      _
    %620 = vsyncpa [#allocation3], 1
    %s621 = scalar_lea.sflag [#allocation3], 1
    %622 = vsyncpa %s621, 1
    %623 = vsyncpa [#allocation6], 1
    %624 = vsyncpa [#allocation4], 1
    %s625 = scalar_lea.sflag [#allocation4], 1
    %626 = vsyncpa %s625, 1

</llo_original>
